<compile_context>
chip_gen: v7x
topology: tpu7x:2x2x1
jax: 0.10.0
libtpu: 0.0.40
codegen_flags: <defaults>
</compile_context>

<pallas_src>
import functools

import jax
import jax.numpy as jnp
from jax.experimental import pallas as pl
from jax.experimental.pallas import tpu as pltpu


def _round_up(x, m):
    return (x + m - 1) // m * m


# ----------------------------- Pallas kernel --------------------------------
def fused_chessblock_kernel(pT_ref, wT_ref, sa_ref, o_ref):
    # pT_ref : [K_total, TILE_M]   bf16  (K-major im2col patches, lanes = M)
    # wT_ref : [C_total, K_total]  bf16  (block-diagonal, BN scale pre-folded) resident
    # sa_ref : [C_total, 2]        f32   (col 0 = BN shift, col 1 = PReLU alpha) resident
    # o_ref  : [C_total, TILE_M]   f32   (lane-dense output)
    y = jnp.dot(wT_ref[...], pT_ref[...], preferred_element_type=jnp.float32)
    sa = sa_ref[...]
    shift = sa[:, 0:1]
    alpha = sa[:, 1:2]
    z = y + shift                                   # eval-mode BatchNorm2d
    o_ref[...] = jnp.where(z >= 0.0, z, alpha * z)  # per-channel PReLU


def fused_chessblock_call(patches_T, w_T, shift_alpha, *, tile_m=2048):
    K, M = patches_T.shape
    C = w_T.shape[0]
    # Lane-dense M tiles; TILE_M<=8192 keeps double-buffered bf16 patch tiles well
    # inside v7x's 32 MiB scoped-VMEM default (2 * K * TILE_M * 2B).
    tile_m = min(tile_m, _round_up(M, 128))
    m_pad = _round_up(M, tile_m)
    if m_pad != M:
        patches_T = jnp.pad(patches_T, ((0, 0), (0, m_pad - M)))
    out = pl.pallas_call(
        fused_chessblock_kernel,
        out_shape=jax.ShapeDtypeStruct((C, m_pad), jnp.float32),
        grid=(m_pad // tile_m,),
        in_specs=[
            pl.BlockSpec((K, tile_m), lambda i: (0, i)),   # streamed along M
            pl.BlockSpec((C, K), lambda i: (0, 0)),        # resident weight
            pl.BlockSpec((C, 2), lambda i: (0, 0)),        # resident shift/alpha
        ],
        out_specs=pl.BlockSpec((C, tile_m), lambda i: (0, i)),
        compiler_params=pltpu.CompilerParams(
            dimension_semantics=("parallel",)),
    )(patches_T, w_T, shift_alpha)
    return out[:, :M] if m_pad != M else out


# ------------------------ one-time parameter setup ----------------------------
def make_fused_params(branch_specs, in_ch, eps=1e-5):
    """branch_specs: list of (params, kh, kw, ph, pw). Done ONCE, reused per forward.

    Folds BN scale into the conv weights, assembles the block-diagonal transposed
    weight [C_total, K_total] in bf16, and merges BN shift + PReLU alpha into a
    single [C_total, 2] f32 operand."""
    w_blocks, shifts, alphas, geom = [], [], [], []
    for p, kh, kw, ph, pw in branch_specs:
        cout = p["weight"].shape[0]
        scale = p["gamma"] / jnp.sqrt(p["var"] + eps)                 # [Cout]
        shift = p["beta"] - p["mean"] * scale                         # [Cout]
        w_mat = p["weight"].reshape(cout, in_ch * kh * kw) * scale[:, None]
        w_blocks.append(w_mat)
        shifts.append(shift)
        alphas.append(jnp.broadcast_to(p["alpha"], (cout,)))          # handles shared alpha too
        geom.append((kh, kw, ph, pw))

    c_sizes = [w.shape[0] for w in w_blocks]
    k_sizes = [w.shape[1] for w in w_blocks]
    c_total, k_total = sum(c_sizes), sum(k_sizes)

    wT = jnp.zeros((c_total, k_total), jnp.float32)
    r0 = c0 = 0
    for wb in w_blocks:
        c, k = wb.shape
        wT = wT.at[r0:r0 + c, c0:c0 + k].set(wb)
        r0 += c
        c0 += k

    shift_alpha = jnp.stack(
        [jnp.concatenate(shifts), jnp.concatenate(alphas)], axis=1)   # [C_total, 2]
    return dict(wT=wT.astype(jnp.bfloat16),
                shift_alpha=shift_alpha.astype(jnp.float32),
                branch_geom=tuple(geom))


# ------------------------------- JAX glue ------------------------------------
def _im2col_kmajor(x_cf_pad, kh, kw, H, W):
    """x_cf_pad: [C, N, H+2ph, W+2pw] (channel-first, padded, bf16)
    -> patches [C*kh*kw, N*H*W], K ordered (c, kh, kw), M = (n,h,w) row-major."""
    C, N = x_cf_pad.shape[0], x_cf_pad.shape[1]
    M = N * H * W
    slabs = [x_cf_pad[:, :, i:i + H, j:j + W].reshape(C, M)
             for i in range(kh) for j in range(kw)]
    return jnp.stack(slabs, axis=1).reshape(C * kh * kw, M)


def chess_block(x, fused, *, tile_m=2048):
    """Fused forward of ChessBlock. Returns NCHW, channels ordered [v | h | f]."""
    N, _, H, W = x.shape
    # Cast BEFORE the ~K/Cin expansion; channel-first so M stays the trailing dim.
    xt = x.astype(jnp.bfloat16).transpose(1, 0, 2, 3)                 # [C, N, H, W]
    patch_list = []
    for kh, kw, ph, pw in fused["branch_geom"]:
        xp = jnp.pad(xt, ((0, 0), (0, 0), (ph, ph), (pw, pw)))
        patch_list.append(_im2col_kmajor(xp, kh, kw, H, W))
    patches_all = jnp.concatenate(patch_list, axis=0)                 # [K_total, M] bf16

    out_cm = fused_chessblock_call(
        patches_all, fused["wT"], fused["shift_alpha"], tile_m=tile_m)  # [C_total, M]

    c_total = fused["wT"].shape[0]
    # [C_total, M] (m = n,h,w row-major) -> NCHW; channel order v|h|f == torch.cat dim=1.
    return out_cm.reshape(c_total, N, H, W).transpose(1, 0, 2, 3)


# ------------------------------ parameters -----------------------------------
def make_branch_params(key, in_ch, out_ch, kh, kw):
    k1, k2, k3, k4, k5 = jax.random.split(key, 5)
    fan_in = in_ch * kh * kw
    weight = jax.random.normal(k1, (out_ch, in_ch, kh, kw), jnp.float32) / jnp.sqrt(fan_in)
    bn_gamma = 1.0 + 0.1 * jax.random.normal(k2, (out_ch,), jnp.float32)
    bn_beta = 0.1 * jax.random.normal(k3, (out_ch,), jnp.float32)
    bn_mean = 0.05 * jax.random.normal(k4, (out_ch,), jnp.float32)
    bn_var = jnp.ones((out_ch,), jnp.float32)
    prelu_a = 0.25 + 0.05 * jax.random.normal(k5, (out_ch,), jnp.float32)
    return dict(weight=weight, gamma=bn_gamma, beta=bn_beta,
                mean=bn_mean, var=bn_var, alpha=prelu_a)


# ---------------------------- pure-JAX reference ------------------------------
def reference_chess_block(x, params_list, eps=1e-5):
    pads = [(7, 0), (0, 7), (3, 3)]
    outs = []
    for p, (ph, pw) in zip(params_list, pads):
        y = jax.lax.conv_general_dilated(
            x, p["weight"], window_strides=(1, 1),
            padding=((ph, ph), (pw, pw)),
            dimension_numbers=("NCHW", "OIHW", "NCHW"))
        scale = (p["gamma"] / jnp.sqrt(p["var"] + eps))[None, :, None, None]
        z = (y - p["mean"][None, :, None, None]) * scale + p["beta"][None, :, None, None]
        a = p["alpha"][None, :, None, None]
        outs.append(jnp.where(z >= 0.0, z, a * z))
    return jnp.concatenate(outs, axis=1)


if __name__ == "__main__":
    # 4 chess boards (8x8), 4 input planes -> M = N*H*W = 256 (two lane-dense tiles).
    N, in_ch, H, W = 4, 4, 8, 8
    v_conv_ch, h_conv_ch, f_conv_ch = 4, 4, 8

    key = jax.random.PRNGKey(0)
    kx, kv, kh_, kf = jax.random.split(key, 4)
    x = jax.random.normal(kx, (N, in_ch, H, W), jnp.float32)

    # TODO(synk): BatchNorm2d implemented in eval mode (running stats folded into the
    # fused weight/shift); training-mode batch statistics are not computed.
    v_params = make_branch_params(kv, in_ch, v_conv_ch, 15, 1)   # vconv1: (15,1), pad (7,0)
    h_params = make_branch_params(kh_, in_ch, h_conv_ch, 1, 15)  # hconv1: (1,15), pad (0,7)
    f_params = make_branch_params(kf, in_ch, f_conv_ch, 7, 7)    # fullconv1: 7x7,  pad 3

    # One-time constant prep (hoisted out of the per-forward path).
    fused = make_fused_params(
        [(v_params, 15, 1, 7, 0),
         (h_params, 1, 15, 0, 7),
         (f_params, 7, 7, 3, 3)],
        in_ch)

    # tile_m=128 at this toy size exercises the tiled ("parallel") grid path; for real
    # batches keep the default 2048 (safe on v5e/v6e/v7x VMEM budgets).
    fwd = jax.jit(functools.partial(chess_block, fused=fused, tile_m=128))
    out = fwd(x)
    jax.block_until_ready(out)
    assert out.shape == (N, v_conv_ch + h_conv_ch + f_conv_ch, H, W), out.shape

    # Sanity check vs. pure-JAX f32 conv reference (loose tol: bf16 MXU operands).
    ref = reference_chess_block(x, [v_params, h_params, f_params])
    max_err = float(jnp.max(jnp.abs(out - ref)))
    assert max_err < 1e-1, f"max abs error {max_err}"

    print("KERNEL_OK")
</pallas_src>

<mosaic_0001>
module attributes {stable_mosaic.version = 11 : i64} {
  func.func @fused_chessblock_kernel(%arg0: i32, %arg1: memref<316x128xbf16, #tpu.memory_space<vmem>>, %arg2: memref<16x316xbf16, #tpu.memory_space<vmem>>, %arg3: memref<16x2xf32, #tpu.memory_space<vmem>>, %arg4: memref<16x128xf32, #tpu.memory_space<vmem>>) attributes {dimension_semantics = [#tpu.dimension_semantics<parallel>], iteration_bounds = array<i64: 2>, scalar_prefetch = 0 : i64, scratch_operands = 0 : i64, tpu.core_type = #tpu.core_type<tc>, window_params = [{transform_indices = @transform_0, window_bounds = array<i64: 316, 128>}, {pipeline_mode = #tpu.pipeline_mode<synchronous>, transform_indices = @transform_1, window_bounds = array<i64: 16, 316>}, {pipeline_mode = #tpu.pipeline_mode<synchronous>, transform_indices = @transform_2, window_bounds = array<i64: 16, 2>}, {transform_indices = @transform_3, window_bounds = array<i64: 16, 128>}]} {
    %c0 = arith.constant 0 : index
    %c0_0 = arith.constant 0 : index
    %0 = vector.load %arg2[%c0, %c0_0] : memref<16x316xbf16, #tpu.memory_space<vmem>>, vector<16x316xbf16>
    %c0_1 = arith.constant 0 : index
    %c0_2 = arith.constant 0 : index
    %1 = vector.load %arg1[%c0_1, %c0_2] : memref<316x128xbf16, #tpu.memory_space<vmem>>, vector<316x128xbf16>
    %cst = arith.constant dense<0.000000e+00> : vector<16x128xf32>
    %2 = tpu.matmul %0, %1, %cst {dimension_numbers = #tpu.dot_dimension_numbers<[1], [0], [0], [1], [0, 0, 1, 1], [], []>} : vector<16x316xbf16>, vector<316x128xbf16>, vector<16x128xf32> -> vector<16x128xf32>
    %c0_3 = arith.constant 0 : index
    %c0_4 = arith.constant 0 : index
    %3 = vector.load %arg3[%c0_3, %c0_4] : memref<16x2xf32, #tpu.memory_space<vmem>>, vector<16x2xf32>
    %4 = vector.extract_strided_slice %3 {offsets = [0, 0], sizes = [16, 1], strides = [1, 1]} : vector<16x2xf32> to vector<16x1xf32>
    %5 = vector.extract_strided_slice %3 {offsets = [0, 1], sizes = [16, 1], strides = [1, 1]} : vector<16x2xf32> to vector<16x1xf32>
    %6 = vector.broadcast %4 : vector<16x1xf32> to vector<16x128xf32>
    %7 = arith.addf %2, %6 : vector<16x128xf32>
    %cst_5 = arith.constant 0.000000e+00 : f32
    %8 = vector.broadcast %cst_5 : f32 to vector<16x128xf32>
    %9 = arith.cmpf oge, %7, %8 : vector<16x128xf32>
    %10 = vector.broadcast %5 : vector<16x1xf32> to vector<16x128xf32>
    %11 = arith.mulf %10, %7 : vector<16x128xf32>
    %12 = arith.select %9, %7, %11 : vector<16x128xi1>, vector<16x128xf32>
    %c0_6 = arith.constant 0 : index
    %c0_7 = arith.constant 0 : index
    %13 = vector.load %arg4[%c0_6, %c0_7] : memref<16x128xf32, #tpu.memory_space<vmem>>, vector<16x128xf32>
    tpu.vector_store %arg4[%c0_6, %c0_7], %12 {strides = array<i32>} : memref<16x128xf32, #tpu.memory_space<vmem>>, vector<16x128xf32>,
    return
  }
  func.func @transform_0(%arg0: i32) -> (i32, i32) {
    %c0_i32 = arith.constant 0 : i32
    %c0_i32_0 = arith.constant 0 : i32
    return %c0_i32, %arg0 : i32, i32
  }
  func.func @transform_1(%arg0: i32) -> (i32, i32) {
    %c0_i32 = arith.constant 0 : i32
    %c0_i32_0 = arith.constant 0 : i32
    %c0_i32_1 = arith.constant 0 : i32
    return %c0_i32, %c0_i32_0 : i32, i32
  }
  func.func @transform_2(%arg0: i32) -> (i32, i32) {
    %c0_i32 = arith.constant 0 : i32
    %c0_i32_0 = arith.constant 0 : i32
    %c0_i32_1 = arith.constant 0 : i32
    return %c0_i32, %c0_i32_0 : i32, i32
  }
  func.func @transform_3(%arg0: i32) -> (i32, i32) {
    %c0_i32 = arith.constant 0 : i32
    %c0_i32_0 = arith.constant 0 : i32
    return %c0_i32, %arg0 : i32, i32
  }
}

</mosaic_0001>

<llo_original>
// kernel: chess_block.1
$region0: #{chess_block.1}
  #allocation0 [shape = 'u32[]', space=smem, size = 0x4, offset = 0x4, fixed_abs, tag = 'smem constant byte address 0x4 - core index']
  #allocation1 [shape = 'u32[144,128]{1,0:T(1,128)}', space=vmem, size = 0x12000, scoped, tag = 'internal scratch']
  %s0 = inlined_call_operand.vmem [shape: bf16[316,256], index: 0, kind: input, shape index: {}]
  %s1 = inlined_call_operand.vmem [shape: bf16[16,316], index: 1, kind: input, shape index: {}]
  %s2 = inlined_call_operand.vmem [shape: f32[16,2], index: 2, kind: input, shape index: {}]
  %s3 = inlined_call_operand.vmem [shape: f32[16,256], index: 3, kind: output, shape index: {}]
  %s4 = sld [smem:[#allocation0]]
  $region120: #{chess_block.1} parent=0
    _
  %s6 = ssub.s32 1, %s4
  %s7 = scalar_select 0, %s6, %s4
  $region1: #{chess_block.1} parent=0
    #allocation2 [shape = 'u8[163840]{0}', space=vmem, size = 0x28000, scoped, tag = 'input window, operand 0']
    #allocation3 [shape = 'u8[16384]{0}', space=vmem, size = 0x4000, scoped, tag = 'output window, operand 0']
    loop: start=0, step=1, limit=4
    $region2: #{chess_block.1} parent=1 // loop_pre_header
      _
    $region3: #{chess_block.1} parent=1 // loop_header
      %s9 = sphi 0, %s13
      %p10 = scmp.ge.s32.totalorder %s9, 4
      %s19 = sphi 0, %s21
      %s22 = sphi 0, %s19
      %s23 = sphi 0, %s22
      %s39 = sphi 0, %s23
      %s43 = sphi 0, %s43
      %s45 = sphi 0, %s43
      %s46 = sphi 0, %s45
      %s60 = sphi 0, %s46
      %s64 = sphi 0, %s64
      %s66 = sphi 0, %s64
      %s67 = sphi 0, %s66
      %s81 = sphi 0, %s67
      %s87 = sphi 0, %s89
      %s90 = sphi 0, %s87
      %s91 = sphi 0, %s90
      %s107 = sphi 0, %s91
    $region4: #{chess_block.1} parent=1 // loop_header_branch
      %12 = sbr.rel (%p10) target = $region8
    $region5: #{chess_block.1} parent=1 // loop_body
      %s14 = ssub.s32 %s9, 1
      %s15 = ssub.s32 %s9, 2
      %s16 = sadd.s32 %s9, 1
      %s17 = ssub.s32 %s9, %s16
      %p18 = scmp.eq.s32.totalorder %s17, 0
      %s20 = sadd.s32 %s19, 1
      %s21 = scalar_select %p18, %s19, %s20
      %p24 = pneg %p18
      %p25 = scmp.eq.s32.totalorder %s9, 1
      %p26 = por %p24, %p25
      %p27 = scmp.ne.s32.totalorder %s19, %s22
      %p28 = scmp.eq.s32.totalorder %s9, 0
      %p29 = por %p27, %p28
      %p30 = scmp.ne.s32.totalorder %s19, %s22
      %p31 = scmp.eq.s32.totalorder %s14, 1
      %p32 = por %p30, %p31
      %p33 = scmp.ne.s32.totalorder %s22, %s23
      %p34 = scmp.eq.s32.totalorder %s14, 0
      %p35 = por %p33, %p34
      %p36 = scmp.ne.s32.totalorder %s22, %s23
      %p37 = scmp.eq.s32.totalorder %s15, 1
      %p38 = por %p36, %p37
      %p40 = scmp.ne.s32.totalorder %s23, %s39
      %p41 = scmp.eq.s32.totalorder %s15, 0
      %p42 = por %p40, %p41
      %s44 = sadd.s32 %s43, 1
      %p47 = scmp.eq.s32.totalorder %s9, 1
      %p48 = scmp.ne.s32.totalorder %s43, %s45
      %p49 = scmp.eq.s32.totalorder %s9, 0
      %p50 = por %p48, %p49
      %p51 = scmp.ne.s32.totalorder %s43, %s45
      %p52 = scmp.eq.s32.totalorder %s14, 1
      %p53 = por %p51, %p52
      %p54 = scmp.ne.s32.totalorder %s45, %s46
      %p55 = scmp.eq.s32.totalorder %s14, 0
      %p56 = por %p54, %p55
      %p57 = scmp.ne.s32.totalorder %s45, %s46
      %p58 = scmp.eq.s32.totalorder %s15, 1
      %p59 = por %p57, %p58
      %p61 = scmp.ne.s32.totalorder %s46, %s60
      %p62 = scmp.eq.s32.totalorder %s15, 0
      %p63 = por %p61, %p62
      %s65 = sadd.s32 %s64, 1
      %p68 = scmp.eq.s32.totalorder %s9, 1
      %p69 = scmp.ne.s32.totalorder %s64, %s66
      %p70 = scmp.eq.s32.totalorder %s9, 0
      %p71 = por %p69, %p70
      %p72 = scmp.ne.s32.totalorder %s64, %s66
      %p73 = scmp.eq.s32.totalorder %s14, 1
      %p74 = por %p72, %p73
      %p75 = scmp.ne.s32.totalorder %s66, %s67
      %p76 = scmp.eq.s32.totalorder %s14, 0
      %p77 = por %p75, %p76
      %p78 = scmp.ne.s32.totalorder %s66, %s67
      %p79 = scmp.eq.s32.totalorder %s15, 1
      %p80 = por %p78, %p79
      %p82 = scmp.ne.s32.totalorder %s67, %s81
      %p83 = scmp.eq.s32.totalorder %s15, 0
      %p84 = por %p82, %p83
      %s85 = ssub.s32 %s9, %s16
      %p86 = scmp.eq.s32.totalorder %s85, 0
      %s88 = sadd.s32 %s87, 1
      %s89 = scalar_select %p86, %s87, %s88
      %p92 = pneg %p86
      %p93 = scmp.eq.s32.totalorder %s9, 1
      %p94 = por %p92, %p93
      %p95 = scmp.ne.s32.totalorder %s87, %s90
      %p96 = scmp.eq.s32.totalorder %s9, 0
      %p97 = por %p95, %p96
      %p98 = scmp.ne.s32.totalorder %s87, %s90
      %p99 = scmp.eq.s32.totalorder %s14, 1
      %p100 = por %p98, %p99
      %p101 = scmp.ne.s32.totalorder %s90, %s91
      %p102 = scmp.eq.s32.totalorder %s14, 0
      %p103 = por %p101, %p102
      %p104 = scmp.ne.s32.totalorder %s90, %s91
      %p105 = scmp.eq.s32.totalorder %s15, 1
      %p106 = por %p104, %p105
      %p108 = scmp.ne.s32.totalorder %s91, %s107
      %p109 = scmp.eq.s32.totalorder %s15, 0
      %p110 = por %p108, %p109
      %p111 = scmp.le.s32.totalorder 1, %s9
      %p112 = scmp.lt.s32.totalorder %s9, 3
      %p113 = pnand %p111, %p112
      %p114 = pneg %p113
      // Predicated region
      $region9: #{chess_block.1} parent=5 // pred_check
        _
      $region10: #{chess_block.1} parent=5 // pred_check_branch
        %116 = sbr.rel (%p113) target = $region12
      $region11: #{chess_block.1} parent=5 // pred_region
        %s117 = ssub.s32 %s9, 1
        // Predicated region
        $region13: #{chess_block.1} parent=11 // pred_check
          %p118 = pneg %p56
        $region14: #{chess_block.1} parent=11 // pred_check_branch
          %120 = sbr.rel (%p118) target = $region16
        $region15: #{chess_block.1} parent=11 // pred_region
          _
        $region16: #{chess_block.1} parent=11 // pred_fallthru
          _
        // Predicated region
        $region17: #{chess_block.1} parent=11 // pred_check
          %p121 = pneg %p77
        $region18: #{chess_block.1} parent=11 // pred_check_branch
          %123 = sbr.rel (%p121) target = $region20
        $region19: #{chess_block.1} parent=11 // pred_region
          _
        $region20: #{chess_block.1} parent=11 // pred_fallthru
          _
      $region12: #{chess_block.1} parent=5 // pred_fallthru
        _
      %p124 = scmp.lt.s32.totalorder %s9, 2
      // Predicated region
      $region21: #{chess_block.1} parent=5 // pred_check
        %p125 = pneg %p124
      $region22: #{chess_block.1} parent=5 // pred_check_branch
        %127 = sbr.rel (%p125) target = $region24
      $region23: #{chess_block.1} parent=5 // pred_region
        // Predicated region
        $region25: #{chess_block.1} parent=23 // pred_check
          %p128 = pneg %p29
        $region26: #{chess_block.1} parent=23 // pred_check_branch
          %130 = sbr.rel (%p128) target = $region28
        $region27: #{chess_block.1} parent=23 // pred_region
          %s131 = sand.u32 %s19, 1
          %s132 = sand.u32 %s19, 1
          %s133 = smul.addr %s132, 160
          %s134 = scalar_lea.vmem [#allocation2], %s133
          %s135 = smul.addr %s9, 4
          %s136 = scalar_lea.vmem %s0, %s135
          // Predicated region
          $region29: #{chess_block.1} parent=27 // pred_check
            _
          $region30: #{chess_block.1} parent=27 // pred_check_branch
            %138 = sbr.rel (0) target = $region32
          $region31: #{chess_block.1} parent=27 // pred_region
            // Predicated region
            $region33: #{chess_block.1} parent=31 // pred_check
              _
            $region34: #{chess_block.1} parent=31 // pred_check_branch
              %140 = sbr.rel target = $region36
            $region35: #{chess_block.1} parent=31 // pred_region
              // Predicated region
              $region48: #{chess_block.1} parent=35 // pred_check
                _
              $region49: #{chess_block.1} parent=35 // pred_check_branch
                %233 = sbr.rel (0) target = $region51
              $region50: #{chess_block.1} parent=35 // pred_region
                loop: start=0, step=1, limit=1
                $region52: #{chess_block.1} parent=50 // loop_pre_header
                  _
                $region53: #{chess_block.1} parent=50 // loop_header
                  %s235 = sphi 0, %s239
                  %p236 = scmp.ge.s32.totalorder %s235, 1
                  %s240 = sphi %s136, %s136
                  %s241 = sphi %s134, %s134
                $region54: #{chess_block.1} parent=50 // loop_header_branch
                  %238 = sbr.rel (%p236) target = $region58
                $region55: #{chess_block.1} parent=50 // loop_body
                  _
                $region56: #{chess_block.1} parent=50 // loop_footer
                  %s239 = sadd.s32 1, %s235
                $region57: #{chess_block.1} parent=50 // loop_footer_branch
                  %234 = sbr.rel target = $region53
                $region58: #{chess_block.1} parent=50 // loop_exit
                  _
                loop: start=0, step=1, limit=1
                $region59: #{chess_block.1} parent=50 // loop_pre_header
                  _
                $region60: #{chess_block.1} parent=50 // loop_header
                  %s244 = sphi 0, %s248
                  %p245 = scmp.ge.s32.totalorder %s244, 1
                  %s249 = sphi %s136, %s136
                  %s250 = sphi %s134, %s134
                $region61: #{chess_block.1} parent=50 // loop_header_branch
                  %247 = sbr.rel (%p245) target = $region65
                $region62: #{chess_block.1} parent=50 // loop_body
                  %v251 = vld [vmem:[%s249] sm:$0xf]
                  %252 = vst [vmem:[%s250] sm:$0xf] %v251
                  %v253 = vld [vmem:[%s249 + $0x8] sm:$0xf]
                  %254 = vst [vmem:[%s250 + $0x4] sm:$0xf] %v253
                  %v255 = vld [vmem:[%s249 + $0x10] sm:$0xf]
                  %256 = vst [vmem:[%s250 + $0x8] sm:$0xf] %v255
                  %v257 = vld [vmem:[%s249 + $0x18] sm:$0xf]
                  %258 = vst [vmem:[%s250 + $0xc] sm:$0xf] %v257
                  %v259 = vld [vmem:[%s249 + $0x20] sm:$0xf]
                  %260 = vst [vmem:[%s250 + $0x10] sm:$0xf] %v259
                  %v261 = vld [vmem:[%s249 + $0x28] sm:$0xf]
                  %262 = vst [vmem:[%s250 + $0x14] sm:$0xf] %v261
                  %v263 = vld [vmem:[%s249 + $0x30] sm:$0xf]
                  %264 = vst [vmem:[%s250 + $0x18] sm:$0xf] %v263
                  %v265 = vld [vmem:[%s249 + $0x38] sm:$0xf]
                  %266 = vst [vmem:[%s250 + $0x1c] sm:$0xf] %v265
                  %v267 = vld [vmem:[%s249 + $0x40] sm:$0xf]
                  %268 = vst [vmem:[%s250 + $0x20] sm:$0xf] %v267
                  %v269 = vld [vmem:[%s249 + $0x48] sm:$0xf]
                  %270 = vst [vmem:[%s250 + $0x24] sm:$0xf] %v269
                  %v271 = vld [vmem:[%s249 + $0x50] sm:$0xf]
                  %272 = vst [vmem:[%s250 + $0x28] sm:$0xf] %v271
                  %v273 = vld [vmem:[%s249 + $0x58] sm:$0xf]
                  %274 = vst [vmem:[%s250 + $0x2c] sm:$0xf] %v273
                  %v275 = vld [vmem:[%s249 + $0x60] sm:$0xf]
                  %276 = vst [vmem:[%s250 + $0x30] sm:$0xf] %v275
                  %v277 = vld [vmem:[%s249 + $0x68] sm:$0xf]
                  %278 = vst [vmem:[%s250 + $0x34] sm:$0xf] %v277
                  %v279 = vld [vmem:[%s249 + $0x70] sm:$0xf]
                  %280 = vst [vmem:[%s250 + $0x38] sm:$0xf] %v279
                  %v281 = vld [vmem:[%s249 + $0x78] sm:$0xf]
                  %282 = vst [vmem:[%s250 + $0x3c] sm:$0xf] %v281
                  %v283 = vld [vmem:[%s249 + $0x80] sm:$0xf]
                  %284 = vst [vmem:[%s250 + $0x40] sm:$0xf] %v283
                  %v285 = vld [vmem:[%s249 + $0x88] sm:$0xf]
                  %286 = vst [vmem:[%s250 + $0x44] sm:$0xf] %v285
                  %v287 = vld [vmem:[%s249 + $0x90] sm:$0xf]
                  %288 = vst [vmem:[%s250 + $0x48] sm:$0xf] %v287
                  %v289 = vld [vmem:[%s249 + $0x98] sm:$0xf]
                  %290 = vst [vmem:[%s250 + $0x4c] sm:$0xf] %v289
                  %v291 = vld [vmem:[%s249 + $0xa0] sm:$0xf]
                  %292 = vst [vmem:[%s250 + $0x50] sm:$0xf] %v291
                  %v293 = vld [vmem:[%s249 + $0xa8] sm:$0xf]
                  %294 = vst [vmem:[%s250 + $0x54] sm:$0xf] %v293
                  %v295 = vld [vmem:[%s249 + $0xb0] sm:$0xf]
                  %296 = vst [vmem:[%s250 + $0x58] sm:$0xf] %v295
                  %v297 = vld [vmem:[%s249 + $0xb8] sm:$0xf]
                  %298 = vst [vmem:[%s250 + $0x5c] sm:$0xf] %v297
                  %v299 = vld [vmem:[%s249 + $0xc0] sm:$0xf]
                  %300 = vst [vmem:[%s250 + $0x60] sm:$0xf] %v299
                  %v301 = vld [vmem:[%s249 + $0xc8] sm:$0xf]
                  %302 = vst [vmem:[%s250 + $0x64] sm:$0xf] %v301
                  %v303 = vld [vmem:[%s249 + $0xd0] sm:$0xf]
                  %304 = vst [vmem:[%s250 + $0x68] sm:$0xf] %v303
                  %v305 = vld [vmem:[%s249 + $0xd8] sm:$0xf]
                  %306 = vst [vmem:[%s250 + $0x6c] sm:$0xf] %v305
                  %v307 = vld [vmem:[%s249 + $0xe0] sm:$0xf]
                  %308 = vst [vmem:[%s250 + $0x70] sm:$0xf] %v307
                  %v309 = vld [vmem:[%s249 + $0xe8] sm:$0xf]
                  %310 = vst [vmem:[%s250 + $0x74] sm:$0xf] %v309
                  %v311 = vld [vmem:[%s249 + $0xf0] sm:$0xf]
                  %312 = vst [vmem:[%s250 + $0x78] sm:$0xf] %v311
                  %v313 = vld [vmem:[%s249 + $0xf8] sm:$0xf]
                  %314 = vst [vmem:[%s250 + $0x7c] sm:$0xf] %v313
                  %v315 = vld [vmem:[%s249 + $0x100] sm:$0xf]
                  %316 = vst [vmem:[%s250 + $0x80] sm:$0xf] %v315
                  %v317 = vld [vmem:[%s249 + $0x108] sm:$0xf]
                  %318 = vst [vmem:[%s250 + $0x84] sm:$0xf] %v317
                  %v319 = vld [vmem:[%s249 + $0x110] sm:$0xf]
                  %320 = vst [vmem:[%s250 + $0x88] sm:$0xf] %v319
                  %v321 = vld [vmem:[%s249 + $0x118] sm:$0xf]
                  %322 = vst [vmem:[%s250 + $0x8c] sm:$0xf] %v321
                  %v323 = vld [vmem:[%s249 + $0x120] sm:$0xf]
                  %324 = vst [vmem:[%s250 + $0x90] sm:$0xf] %v323
                  %v325 = vld [vmem:[%s249 + $0x128] sm:$0xf]
                  %326 = vst [vmem:[%s250 + $0x94] sm:$0xf] %v325
                  %v327 = vld [vmem:[%s249 + $0x130] sm:$0xf]
                  %328 = vst [vmem:[%s250 + $0x98] sm:$0xf] %v327
                  %v329 = vld [vmem:[%s249 + $0x138] sm:$0xf]
                  %330 = vst [vmem:[%s250 + $0x9c] sm:$0xf] %v329
                $region63: #{chess_block.1} parent=50 // loop_footer
                  %s248 = sadd.s32 1, %s244
                $region64: #{chess_block.1} parent=50 // loop_footer_branch
                  %243 = sbr.rel target = $region60
                $region65: #{chess_block.1} parent=50 // loop_exit
                  _
              $region51: #{chess_block.1} parent=35 // pred_fallthru
                _
            $region36: #{chess_block.1} parent=31 // pred_fallthru
              _
            // Predicated region
            $region37: #{chess_block.1} parent=31 // pred_check
              _
            $region38: #{chess_block.1} parent=31 // pred_check_branch
              %142 = sbr.rel (0) target = $region40
            $region39: #{chess_block.1} parent=31 // pred_region
              loop: start=0, step=1, limit=1
              $region41: #{chess_block.1} parent=39 // loop_pre_header
                _
              $region42: #{chess_block.1} parent=39 // loop_header
                %s145 = sphi 0, %s149
                %p146 = scmp.ge.s32.totalorder %s145, 1
                %s150 = sphi %s136, %s136
                %s151 = sphi %s134, %s134
              $region43: #{chess_block.1} parent=39 // loop_header_branch
                %148 = sbr.rel (%p146) target = $region47
              $region44: #{chess_block.1} parent=39 // loop_body
                %v152 = vld [vmem:[%s150] sm:$0xf]
                %153 = vst [vmem:[%s151] sm:$0xf] %v152
                %v154 = vld [vmem:[%s150 + $0x8] sm:$0xf]
                %155 = vst [vmem:[%s151 + $0x4] sm:$0xf] %v154
                %v156 = vld [vmem:[%s150 + $0x10] sm:$0xf]
                %157 = vst [vmem:[%s151 + $0x8] sm:$0xf] %v156
                %v158 = vld [vmem:[%s150 + $0x18] sm:$0xf]
                %159 = vst [vmem:[%s151 + $0xc] sm:$0xf] %v158
                %v160 = vld [vmem:[%s150 + $0x20] sm:$0xf]
                %161 = vst [vmem:[%s151 + $0x10] sm:$0xf] %v160
                %v162 = vld [vmem:[%s150 + $0x28] sm:$0xf]
                %163 = vst [vmem:[%s151 + $0x14] sm:$0xf] %v162
                %v164 = vld [vmem:[%s150 + $0x30] sm:$0xf]
                %165 = vst [vmem:[%s151 + $0x18] sm:$0xf] %v164
                %v166 = vld [vmem:[%s150 + $0x38] sm:$0xf]
                %167 = vst [vmem:[%s151 + $0x1c] sm:$0xf] %v166
                %v168 = vld [vmem:[%s150 + $0x40] sm:$0xf]
                %169 = vst [vmem:[%s151 + $0x20] sm:$0xf] %v168
                %v170 = vld [vmem:[%s150 + $0x48] sm:$0xf]
                %171 = vst [vmem:[%s151 + $0x24] sm:$0xf] %v170
                %v172 = vld [vmem:[%s150 + $0x50] sm:$0xf]
                %173 = vst [vmem:[%s151 + $0x28] sm:$0xf] %v172
                %v174 = vld [vmem:[%s150 + $0x58] sm:$0xf]
                %175 = vst [vmem:[%s151 + $0x2c] sm:$0xf] %v174
                %v176 = vld [vmem:[%s150 + $0x60] sm:$0xf]
                %177 = vst [vmem:[%s151 + $0x30] sm:$0xf] %v176
                %v178 = vld [vmem:[%s150 + $0x68] sm:$0xf]
                %179 = vst [vmem:[%s151 + $0x34] sm:$0xf] %v178
                %v180 = vld [vmem:[%s150 + $0x70] sm:$0xf]
                %181 = vst [vmem:[%s151 + $0x38] sm:$0xf] %v180
                %v182 = vld [vmem:[%s150 + $0x78] sm:$0xf]
                %183 = vst [vmem:[%s151 + $0x3c] sm:$0xf] %v182
                %v184 = vld [vmem:[%s150 + $0x80] sm:$0xf]
                %185 = vst [vmem:[%s151 + $0x40] sm:$0xf] %v184
                %v186 = vld [vmem:[%s150 + $0x88] sm:$0xf]
                %187 = vst [vmem:[%s151 + $0x44] sm:$0xf] %v186
                %v188 = vld [vmem:[%s150 + $0x90] sm:$0xf]
                %189 = vst [vmem:[%s151 + $0x48] sm:$0xf] %v188
                %v190 = vld [vmem:[%s150 + $0x98] sm:$0xf]
                %191 = vst [vmem:[%s151 + $0x4c] sm:$0xf] %v190
                %v192 = vld [vmem:[%s150 + $0xa0] sm:$0xf]
                %193 = vst [vmem:[%s151 + $0x50] sm:$0xf] %v192
                %v194 = vld [vmem:[%s150 + $0xa8] sm:$0xf]
                %195 = vst [vmem:[%s151 + $0x54] sm:$0xf] %v194
                %v196 = vld [vmem:[%s150 + $0xb0] sm:$0xf]
                %197 = vst [vmem:[%s151 + $0x58] sm:$0xf] %v196
                %v198 = vld [vmem:[%s150 + $0xb8] sm:$0xf]
                %199 = vst [vmem:[%s151 + $0x5c] sm:$0xf] %v198
                %v200 = vld [vmem:[%s150 + $0xc0] sm:$0xf]
                %201 = vst [vmem:[%s151 + $0x60] sm:$0xf] %v200
                %v202 = vld [vmem:[%s150 + $0xc8] sm:$0xf]
                %203 = vst [vmem:[%s151 + $0x64] sm:$0xf] %v202
                %v204 = vld [vmem:[%s150 + $0xd0] sm:$0xf]
                %205 = vst [vmem:[%s151 + $0x68] sm:$0xf] %v204
                %v206 = vld [vmem:[%s150 + $0xd8] sm:$0xf]
                %207 = vst [vmem:[%s151 + $0x6c] sm:$0xf] %v206
                %v208 = vld [vmem:[%s150 + $0xe0] sm:$0xf]
                %209 = vst [vmem:[%s151 + $0x70] sm:$0xf] %v208
                %v210 = vld [vmem:[%s150 + $0xe8] sm:$0xf]
                %211 = vst [vmem:[%s151 + $0x74] sm:$0xf] %v210
                %v212 = vld [vmem:[%s150 + $0xf0] sm:$0xf]
                %213 = vst [vmem:[%s151 + $0x78] sm:$0xf] %v212
                %v214 = vld [vmem:[%s150 + $0xf8] sm:$0xf]
                %215 = vst [vmem:[%s151 + $0x7c] sm:$0xf] %v214
                %v216 = vld [vmem:[%s150 + $0x100] sm:$0xf]
                %217 = vst [vmem:[%s151 + $0x80] sm:$0xf] %v216
                %v218 = vld [vmem:[%s150 + $0x108] sm:$0xf]
                %219 = vst [vmem:[%s151 + $0x84] sm:$0xf] %v218
                %v220 = vld [vmem:[%s150 + $0x110] sm:$0xf]
                %221 = vst [vmem:[%s151 + $0x88] sm:$0xf] %v220
                %v222 = vld [vmem:[%s150 + $0x118] sm:$0xf]
                %223 = vst [vmem:[%s151 + $0x8c] sm:$0xf] %v222
                %v224 = vld [vmem:[%s150 + $0x120] sm:$0xf]
                %225 = vst [vmem:[%s151 + $0x90] sm:$0xf] %v224
                %v226 = vld [vmem:[%s150 + $0x128] sm:$0xf]
                %227 = vst [vmem:[%s151 + $0x94] sm:$0xf] %v226
                %v228 = vld [vmem:[%s150 + $0x130] sm:$0xf]
                %229 = vst [vmem:[%s151 + $0x98] sm:$0xf] %v228
                %v230 = vld [vmem:[%s150 + $0x138] sm:$0xf]
                %231 = vst [vmem:[%s151 + $0x9c] sm:$0xf] %v230
              $region45: #{chess_block.1} parent=39 // loop_footer
                %s149 = sadd.s32 1, %s145
              $region46: #{chess_block.1} parent=39 // loop_footer_branch
                %144 = sbr.rel target = $region42
              $region47: #{chess_block.1} parent=39 // loop_exit
                _
            $region40: #{chess_block.1} parent=31 // pred_fallthru
              _
          $region32: #{chess_block.1} parent=27 // pred_fallthru
            _
          %331 = vnop
        $region28: #{chess_block.1} parent=23 // pred_fallthru
          _
      $region24: #{chess_block.1} parent=5 // pred_fallthru
        _
      %p332 = scmp.le.s32.totalorder 1, %s9
      %p333 = scmp.lt.s32.totalorder %s9, 3
      %p334 = pnand %p332, %p333
      %p335 = pneg %p334
      // Predicated region
      $region66: #{chess_block.1} parent=5 // pred_check
        _
      $region67: #{chess_block.1} parent=5 // pred_check_branch
        %337 = sbr.rel (%p334) target = $region69
      $region68: #{chess_block.1} parent=5 // pred_region
        %s338 = ssub.s32 %s9, 1
        %s339 = sand.u32 %s22, 1
        %s340 = sand.u32 %s22, 1
        %s341 = smul.addr %s340, 160
        %s342 = scalar_lea.vmem [#allocation2], %s341
        // Predicated region
        $region70: #{chess_block.1} parent=68 // pred_check
          %p343 = pneg %p35
        $region71: #{chess_block.1} parent=68 // pred_check_branch
          %345 = sbr.rel (%p343) target = $region73
        $region72: #{chess_block.1} parent=68 // pred_region
          _
        $region73: #{chess_block.1} parent=68 // pred_fallthru
          _
        %s346 = sand.u32 %s22, 1
        %s347 = sand.u32 %s22, 1
        %s348 = smul.addr %s347, 160
        %s349 = scalar_lea.vmem [#allocation2], %s348
        %p350 = pneg %p35
        %p351 = pneg %p32
        %p352 = pneg %p56
        %p353 = pneg %p53
        %p354 = pneg %p77
        %p355 = pneg %p74
        %p356 = pneg %p103
        %p357 = pneg %p100
        %s358 = sand.u32 %s90, 1
        %s359 = sand.u32 %s90, 1
        %s360 = smul.addr %s359, 16
        %s361 = scalar_lea.vmem [#allocation3], %s360
        %v363 = vld [vmem:[%s1] sm:$0xff]
        %v364 = vld [vmem:[%s1 + $0x8] sm:$0xf]
        %v365 = vld [vmem:[%s1 + $0xc] sm:$0xff]
        %v366 = vld [vmem:[%s1 + $0x14] sm:$0xf]
        %v367 = vld [vmem:[%s342] sm:$0xf]
        %v368 = vld [vmem:[%s342 + $0x4] sm:$0xf]
        %v369 = vld [vmem:[%s342 + $0x8] sm:$0xf]
        %v370 = vld [vmem:[%s342 + $0xc] sm:$0xf]
        %v371 = vld [vmem:[%s342 + $0x10] sm:$0xf]
        %v372 = vld [vmem:[%s342 + $0x14] sm:$0xf]
        %v373 = vld [vmem:[%s342 + $0x18] sm:$0xf]
        %v374 = vld [vmem:[%s342 + $0x1c] sm:$0xf]
        %v375 = vld [vmem:[%s342 + $0x20] sm:$0xf]
        %v376 = vld [vmem:[%s342 + $0x24] sm:$0xf]
        %v377 = vld [vmem:[%s342 + $0x28] sm:$0xf]
        %v378 = vld [vmem:[%s342 + $0x2c] sm:$0xf]
        %v379 = vld [vmem:[%s342 + $0x30] sm:$0xf]
        %v380 = vld [vmem:[%s342 + $0x34] sm:$0xf]
        %v381 = vld [vmem:[%s342 + $0x38] sm:$0xf]
        %v382 = vld [vmem:[%s342 + $0x3c] sm:$0xf]
        %v383 = vld [vmem:[%s342 + $0x40] sm:$0xf]
        %v384 = vld [vmem:[%s342 + $0x44] sm:$0xf]
        %v385 = vld [vmem:[%s342 + $0x48] sm:$0xf]
        %v386 = vld [vmem:[%s342 + $0x4c] sm:$0xf]
        %v387 = vld [vmem:[%s342 + $0x50] sm:$0xf]
        %v388 = vld [vmem:[%s342 + $0x54] sm:$0xf]
        %v389 = vld [vmem:[%s342 + $0x58] sm:$0xf]
        %v390 = vld [vmem:[%s342 + $0x5c] sm:$0xf]
        %v391 = vld [vmem:[%s342 + $0x60] sm:$0xf]
        %v392 = vld [vmem:[%s342 + $0x64] sm:$0xf]
        %v393 = vld [vmem:[%s342 + $0x68] sm:$0xf]
        %v394 = vld [vmem:[%s342 + $0x6c] sm:$0xf]
        %v395 = vld [vmem:[%s342 + $0x70] sm:$0xf]
        %v396 = vld [vmem:[%s342 + $0x74] sm:$0xf]
        %v397 = vld [vmem:[%s342 + $0x78] sm:$0xf]
        %v398 = vld [vmem:[%s342 + $0x7c] sm:$0xf]
        %v399 = vld [vmem:[%s342 + $0x80] sm:$0xf]
        %v400 = vld [vmem:[%s342 + $0x84] sm:$0xf]
        %v401 = vld [vmem:[%s342 + $0x88] sm:$0xf]
        %v402 = vld [vmem:[%s342 + $0x8c] sm:$0xf]
        %v403 = vld [vmem:[%s342 + $0x90] sm:$0xf]
        %v404 = vld [vmem:[%s342 + $0x94] sm:$0xf]
        %v405 = vld [vmem:[%s342 + $0x98] sm:$0xf]
        %v406 = vld [vmem:[%s342 + $0x9c] sm:$0x3]
        %v407 = vld [vmem:[%s2] sm:$0xff]
        %v408 = vld [vmem:[%s2 + $0x8] sm:$0xff]
        %410 = vset.pattern.permute.xlu0 0
        %411 = vperm.xlu0 %410, %v407
        %v412 = vpop.permute.xlu0 %411
        %415 = vset.pattern.permute.xlu0 0
        %416 = vperm.xlu0 %415, %v408
        %v417 = vpop.permute.xlu0 %416
        %v423 = vunpack.c.l.b16 %v363
        %v424 = vunpack.c.h.b16 %v363
        %v425 = vunpack.c.l.b16 %v364
        %v426 = vunpack.c.l.b16 %v365
        %v427 = vunpack.c.h.b16 %v365
        %v428 = vunpack.c.l.b16 %v366
        %v429 = vpack.c.b16 %v426, %v423
        %v430 = vpack.c.b16 %v427, %v424
        %v431 = vpack.c.b16 %v428, %v425
        %v474 = vunpack.c.l.b16 %v367
        %v475 = vunpack.c.l.b16 %v368
        %v476 = vunpack.c.l.b16 %v369
        %v477 = vunpack.c.l.b16 %v370
        %v478 = vunpack.c.l.b16 %v371
        %v479 = vunpack.c.l.b16 %v372
        %v480 = vunpack.c.l.b16 %v373
        %v481 = vunpack.c.l.b16 %v374
        %v482 = vunpack.c.l.b16 %v375
        %v483 = vunpack.c.l.b16 %v376
        %v484 = vunpack.c.l.b16 %v377
        %v485 = vunpack.c.l.b16 %v378
        %v486 = vunpack.c.l.b16 %v379
        %v487 = vunpack.c.l.b16 %v380
        %v488 = vunpack.c.l.b16 %v381
        %v489 = vunpack.c.l.b16 %v382
        %v490 = vunpack.c.l.b16 %v383
        %v491 = vunpack.c.l.b16 %v384
        %v492 = vunpack.c.l.b16 %v385
        %v493 = vunpack.c.l.b16 %v386
        %v494 = vunpack.c.l.b16 %v387
        %v495 = vunpack.c.l.b16 %v388
        %v496 = vunpack.c.l.b16 %v389
        %v497 = vunpack.c.l.b16 %v390
        %v498 = vunpack.c.l.b16 %v391
        %v499 = vunpack.c.l.b16 %v392
        %v500 = vunpack.c.l.b16 %v393
        %v501 = vunpack.c.l.b16 %v394
        %v502 = vunpack.c.l.b16 %v395
        %v503 = vunpack.c.l.b16 %v396
        %v504 = vunpack.c.l.b16 %v397
        %v505 = vunpack.c.l.b16 %v398
        %v506 = vunpack.c.l.b16 %v399
        %v507 = vunpack.c.l.b16 %v400
        %v508 = vunpack.c.l.b16 %v401
        %v509 = vunpack.c.l.b16 %v402
        %v510 = vunpack.c.l.b16 %v403
        %v511 = vunpack.c.l.b16 %v404
        %v512 = vunpack.c.l.b16 %v405
        %v513 = vunpack.c.l.b16 %v406
        %v514 = vpack.c.b16 %v475, %v474
        %v515 = vpack.c.b16 %v477, %v476
        %v516 = vpack.c.b16 %v479, %v478
        %v517 = vpack.c.b16 %v481, %v480
        %v518 = vpack.c.b16 %v483, %v482
        %v519 = vpack.c.b16 %v485, %v484
        %v520 = vpack.c.b16 %v487, %v486
        %v521 = vpack.c.b16 %v489, %v488
        %v522 = vpack.c.b16 %v491, %v490
        %v523 = vpack.c.b16 %v493, %v492
        %v524 = vpack.c.b16 %v495, %v494
        %v525 = vpack.c.b16 %v497, %v496
        %v526 = vpack.c.b16 %v499, %v498
        %v527 = vpack.c.b16 %v501, %v500
        %v528 = vpack.c.b16 %v503, %v502
        %v529 = vpack.c.b16 %v505, %v504
        %v530 = vpack.c.b16 %v507, %v506
        %v531 = vpack.c.b16 %v509, %v508
        %v532 = vpack.c.b16 %v511, %v510
        %v533 = vpack.c.b16 %v513, %v512
        %vm553 = vcmask 490496
        %v555 = vsel %vm553, %v431, 0
        %vm557 = vcmask 1045504
        %v559 = vsel %vm557, %v533, 0
        %561 = vmatprep.subr.bf16.mxu0 0
        %562 = vmatpush1.bf16.msra.mxu0 %v514
        %563 = vmatprep.subr.bf16.mxu0 0
        %564 = vmatpush1.bf16.msra.mxu0 %v515
        %565 = vmatprep.subr.bf16.mxu0 0
        %566 = vmatpush1.bf16.msra.mxu0 %v516
        %567 = vmatprep.subr.bf16.mxu0 0
        %568 = vmatpush1.bf16.msra.mxu0 %v517
        %569 = vmatprep.subr.bf16.mxu0 0
        %570 = vmatpush1.bf16.msra.mxu0 %v518
        %571 = vmatprep.subr.bf16.mxu0 0
        %572 = vmatpush1.bf16.msra.mxu0 %v519
        %573 = vmatprep.subr.bf16.mxu0 0
        %574 = vmatpush1.bf16.msra.mxu0 %v520
        %575 = vmatprep.subr.bf16.mxu0 0
        %576 = vmatpush1.bf16.msra.mxu0 %v521
        %577 = vmatprep.subr.bf16.mxu0 0
        %578 = vmatpush1.bf16.msra.mxu0 %v522
        %579 = vmatprep.subr.bf16.mxu0 0
        %580 = vmatpush1.bf16.msra.mxu0 %v523
        %581 = vmatprep.subr.bf16.mxu0 0
        %582 = vmatpush1.bf16.msra.mxu0 %v524
        %583 = vmatprep.subr.bf16.mxu0 0
        %584 = vmatpush1.bf16.msra.mxu0 %v525
        %585 = vmatprep.subr.bf16.mxu0 0
        %586 = vmatpush1.bf16.msra.mxu0 %v526
        %587 = vmatprep.subr.bf16.mxu0 0
        %588 = vmatpush1.bf16.msra.mxu0 %v527
        %589 = vmatprep.subr.bf16.mxu0 0
        %590 = vmatpush1.bf16.msra.mxu0 %v528
        %591 = vmatprep.subr.bf16.mxu0 0
        %592 = vmatpush1.bf16.msra.mxu0 %v529
        %593 = vmatprep.mubr.bf16.mxu0 %v430
        %594 = vmatmul.mubr.bf16.gmra.mrb[0].mxu0 %v429
        %v595 = vpop.f32.mrb[0].mxu0
        %v596 = vadd.f32 %v412, %v595
        %v597 = vpop.f32.mrb[0].mxu0
        %v598 = vpop.f32.mrb[0].mxu0
        %v599 = vadd.f32 %v417, %v598
        %v600 = vpop.f32.mrb[0].mxu0
        %601 = vdwg.mxu0
        %602 = vmatprep.subr.bf16.mxu0 0
        %603 = vmatpush1.bf16.msra.mxu0 %v530
        %604 = vmatprep.subr.bf16.mxu0 0
        %605 = vmatpush1.bf16.msra.mxu0 %v531
        %606 = vmatprep.subr.bf16.mxu0 0
        %607 = vmatpush1.bf16.msra.mxu0 %v532
        %608 = vmatprep.subr.bf16.mxu0 0
        %609 = vmatpush1.bf16.msra.mxu0 %v559
        %610 = vmatprep.subr.bf16.mxu0 0
        %611 = vmatpush1.bf16.msra.mxu0 0
        %612 = vmatprep.subr.bf16.mxu0 0
        %613 = vmatpush1.bf16.msra.mxu0 0
        %614 = vmatprep.subr.bf16.mxu0 0
        %615 = vmatpush1.bf16.msra.mxu0 0
        %616 = vmatprep.subr.bf16.mxu0 0
        %617 = vmatpush1.bf16.msra.mxu0 0
        %618 = vmatprep.subr.bf16.mxu0 0
        %619 = vmatpush1.bf16.msra.mxu0 0
        %620 = vmatprep.subr.bf16.mxu0 0
        %621 = vmatpush1.bf16.msra.mxu0 0
        %622 = vmatprep.subr.bf16.mxu0 0
        %623 = vmatpush1.bf16.msra.mxu0 0
        %624 = vmatprep.subr.bf16.mxu0 0
        %625 = vmatpush1.bf16.msra.mxu0 0
        %626 = vmatprep.subr.bf16.mxu0 0
        %627 = vmatpush1.bf16.msra.mxu0 0
        %628 = vmatprep.subr.bf16.mxu0 0
        %629 = vmatpush1.bf16.msra.mxu0 0
        %630 = vmatprep.subr.bf16.mxu0 0
        %631 = vmatpush1.bf16.msra.mxu0 0
        %632 = vmatprep.subr.bf16.mxu0 0
        %633 = vmatpush1.bf16.msra.mxu0 0
        %634 = vmatprep.mubr.bf16.mxu0 0
        %635 = vmatmul.mubr.bf16.gmra.mrb[0].mxu0 %v555
        %v636 = vpop.f32.mrb[0].mxu0
        %v637 = vadd.f32 %v596, %v636
        %v638 = vpop.f32.mrb[0].mxu0
        %v639 = vpop.f32.mrb[0].mxu0
        %v640 = vadd.f32 %v599, %v639
        %v641 = vpop.f32.mrb[0].mxu0
        %642 = vdwg.mxu0
        %vm643 = vcmp.ge.f32.partialorder %v637, 0.0
        %vm644 = vcmp.ge.f32.partialorder %v640, 0.0
        %645 = vset.pattern.permute.xlu0 1
        %646 = vperm.xlu0 %645, %v407
        %v647 = vpop.permute.xlu0 %646
        %649 = vset.pattern.permute.xlu0 1
        %650 = vperm.xlu0 %649, %v408
        %v651 = vpop.permute.xlu0 %650
        %v653 = vmul.f32 %v647, %v637
        %v654 = vmul.f32 %v651, %v640
        %v655 = vsel %vm643, %v637, %v653
        %v656 = vsel %vm644, %v640, %v654
        %657 = vst [vmem:[%s361] sm:$0xff] %v655
        %658 = vst [vmem:[%s361 + $0x8] sm:$0xff] %v656
        %s659 = sand.u32 %s90, 1
        %s660 = sand.u32 %s90, 1
        %s661 = smul.addr %s660, 16
        %s662 = scalar_lea.vmem [#allocation3], %s661
        // Predicated region
        $region74: #{chess_block.1} parent=68 // pred_check
          %p663 = pneg %p100
        $region75: #{chess_block.1} parent=68 // pred_check_branch
          %665 = sbr.rel (%p663) target = $region77
        $region76: #{chess_block.1} parent=68 // pred_region
          %s666 = smul.addr %s14, 8
          %s667 = scalar_lea.vmem %s3, %s666
          // Predicated region
          $region78: #{chess_block.1} parent=76 // pred_check
            _
          $region79: #{chess_block.1} parent=76 // pred_check_branch
            %669 = sbr.rel (0) target = $region81
          $region80: #{chess_block.1} parent=76 // pred_region
            // Predicated region
            $region82: #{chess_block.1} parent=80 // pred_check
              _
            $region83: #{chess_block.1} parent=80 // pred_check_branch
              %671 = sbr.rel (0) target = $region85
            $region84: #{chess_block.1} parent=80 // pred_region
              // Predicated region
              $region97: #{chess_block.1} parent=84 // pred_check
                _
              $region98: #{chess_block.1} parent=84 // pred_check_branch
                %688 = sbr.rel (0) target = $region100
              $region99: #{chess_block.1} parent=84 // pred_region
                loop: start=0, step=1, limit=1
                $region101: #{chess_block.1} parent=99 // loop_pre_header
                  _
                $region102: #{chess_block.1} parent=99 // loop_header
                  %s690 = sphi 0, %s694
                  %p691 = scmp.ge.s32.totalorder %s690, 1
                  %s695 = sphi %s662, %s662
                  %s696 = sphi %s667, %s667
                $region103: #{chess_block.1} parent=99 // loop_header_branch
                  %693 = sbr.rel (%p691) target = $region107
                $region104: #{chess_block.1} parent=99 // loop_body
                  %v697 = vld [vmem:[%s695] sm:$0xff]
                  %698 = vst [vmem:[%s696] sm:$0xff] %v697
                  %v699 = vld [vmem:[%s695 + $0x8] sm:$0xff]
                  %700 = vst [vmem:[%s696 + $0x10] sm:$0xff] %v699
                $region105: #{chess_block.1} parent=99 // loop_footer
                  %s694 = sadd.s32 1, %s690
                $region106: #{chess_block.1} parent=99 // loop_footer_branch
                  %689 = sbr.rel target = $region102
                $region107: #{chess_block.1} parent=99 // loop_exit
                  _
              $region100: #{chess_block.1} parent=84 // pred_fallthru
                _
              // Predicated region
              $region108: #{chess_block.1} parent=84 // pred_check
                _
              $region109: #{chess_block.1} parent=84 // pred_check_branch
                %702 = sbr.rel target = $region111
              $region110: #{chess_block.1} parent=84 // pred_region
                _
              $region111: #{chess_block.1} parent=84 // pred_fallthru
                _
            $region85: #{chess_block.1} parent=80 // pred_fallthru
              _
            // Predicated region
            $region86: #{chess_block.1} parent=80 // pred_check
              _
            $region87: #{chess_block.1} parent=80 // pred_check_branch
              %673 = sbr.rel target = $region89
            $region88: #{chess_block.1} parent=80 // pred_region
              loop: start=0, step=1, limit=1
              $region90: #{chess_block.1} parent=88 // loop_pre_header
                _
              $region91: #{chess_block.1} parent=88 // loop_header
                %s676 = sphi 0, %s680
                %p677 = scmp.ge.s32.totalorder %s676, 1
                %s681 = sphi %s662, %s662
                %s682 = sphi %s667, %s667
              $region92: #{chess_block.1} parent=88 // loop_header_branch
                %679 = sbr.rel (%p677) target = $region96
              $region93: #{chess_block.1} parent=88 // loop_body
                %v683 = vld [vmem:[%s681] sm:$0xff]
                %684 = vst [vmem:[%s682] sm:$0xff] %v683
                %v685 = vld [vmem:[%s681 + $0x8] sm:$0xff]
                %686 = vst [vmem:[%s682 + $0x10] sm:$0xff] %v685
              $region94: #{chess_block.1} parent=88 // loop_footer
                %s680 = sadd.s32 1, %s676
              $region95: #{chess_block.1} parent=88 // loop_footer_branch
                %675 = sbr.rel target = $region91
              $region96: #{chess_block.1} parent=88 // loop_exit
                _
            $region89: #{chess_block.1} parent=80 // pred_fallthru
              _
          $region81: #{chess_block.1} parent=76 // pred_fallthru
            _
          %703 = vnop
        $region77: #{chess_block.1} parent=68 // pred_fallthru
          _
      $region69: #{chess_block.1} parent=5 // pred_fallthru
        _
      %p704 = scmp.le.s32.totalorder 2, %s9
      // Predicated region
      $region112: #{chess_block.1} parent=5 // pred_check
        %p705 = pneg %p704
      $region113: #{chess_block.1} parent=5 // pred_check_branch
        %707 = sbr.rel (%p705) target = $region115
      $region114: #{chess_block.1} parent=5 // pred_region
        %s708 = ssub.s32 %s9, 2
        // Predicated region
        $region116: #{chess_block.1} parent=114 // pred_check
          %p709 = pneg %p106
        $region117: #{chess_block.1} parent=114 // pred_check_branch
          %711 = sbr.rel (%p709) target = $region119
        $region118: #{chess_block.1} parent=114 // pred_region
          %s712 = sand.u32 %s91, 1
          %s713 = sand.u32 %s91, 1
          %s714 = smul.addr %s713, 16
          %s715 = scalar_lea.vmem [#allocation3], %s714
        $region119: #{chess_block.1} parent=114 // pred_fallthru
          _
      $region115: #{chess_block.1} parent=5 // pred_fallthru
        _
    $region6: #{chess_block.1} parent=1 // loop_footer
      %s13 = sadd.s32 1, %s9
    $region7: #{chess_block.1} parent=1 // loop_footer_branch
      %8 = sbr.rel target = $region3
    $region8: #{chess_block.1} parent=1 // loop_exit
      _

</llo_original>
